<compile_context>
chip_gen: v6e
topology: v6e:2x2x1
jax: 0.10.0
libtpu: 0.0.40
codegen_flags: <defaults>
</compile_context>

<pallas_src>
import math
from functools import partial

import jax
import jax.numpy as jnp
from jax.experimental import pallas as pl
from jax.experimental.pallas import tpu as pltpu


# ------------------------------- helpers -----------------------------------

def _round_up(x, m):
    return (x + m - 1) // m * m


def _pick_tile(dim, align, pref):
    """Return (tile, padded_dim).  Prefers a tile <= pref that is a multiple of `align`
    and divides `dim` (no padding); uses the full extent for small dims; pads only as a
    last resort."""
    if dim <= pref:
        return dim, dim
    t = (pref // align) * align
    while t >= align:
        if dim % t == 0:
            return t, dim
        t -= align
    padded = _round_up(dim, align)
    t = (pref // align) * align
    while t >= align:
        if padded % t == 0:
            return t, padded
        t -= align
    return align, padded


def _cparams(sem):
    return pltpu.CompilerParams(
        dimension_semantics=sem,
        vmem_limit_bytes=48 * 1024 * 1024,
    )


def _full_spec(shape):
    nd = len(shape)
    return pl.BlockSpec(shape, lambda i, _nd=nd: (0,) * _nd)


# --------------------------- tiled bf16 MXU matmul ---------------------------

def _matmul_kernel(a_ref, b_ref, o_ref, acc_ref):
    @pl.when(pl.program_id(2) == 0)
    def _():
        acc_ref[...] = jnp.zeros_like(acc_ref)

    acc_ref[...] += jnp.dot(a_ref[...], b_ref[...], preferred_element_type=jnp.float32)

    @pl.when(pl.program_id(2) == pl.num_programs(2) - 1)
    def _():
        o_ref[...] = acc_ref[...].astype(o_ref.dtype)


@jax.jit
def pallas_matmul(a, b, *, out_dtype=jnp.float32, tm_pref=256, tn_pref=256, tk_pref=2048):
    """(M,K) @ (K,N) -> (M,N).  bf16 operands on the MXU, f32 accumulation, no bias."""
    M, K = a.shape
    K2, N = b.shape
    assert K == K2
    a = a.astype(jnp.bfloat16)
    b = b.astype(jnp.bfloat16)

    tm, Mp = _pick_tile(M, 8, tm_pref)
    tn, Np = _pick_tile(N, 128, tn_pref)
    tk, Kp = _pick_tile(K, 128, tk_pref)
    if (Mp, Kp) != (M, K):
        a = jnp.pad(a, ((0, Mp - M), (0, Kp - K)))
    if (Kp, Np) != (K, N):
        b = jnp.pad(b, ((0, Kp - K), (0, Np - N)))

    out = pl.pallas_call(
        _matmul_kernel,
        grid=(Mp // tm, Np // tn, Kp // tk),
        in_specs=[
            pl.BlockSpec((tm, tk), lambda i, j, k: (i, k)),
            pl.BlockSpec((tk, tn), lambda i, j, k: (k, j)),
        ],
        out_specs=pl.BlockSpec((tm, tn), lambda i, j, k: (i, j)),
        out_shape=jax.ShapeDtypeStruct((Mp, Np), out_dtype),
        scratch_shapes=[pltpu.VMEM((tm, tn), jnp.float32)],
        compiler_params=_cparams(("parallel", "parallel", "arbitrary")),
    )(a, b)
    if (Mp, Np) != (M, N):
        out = out[:M, :N]
    return out


# ----------------- two-pass BatchNorm (+fused residual / ReLU) ----------------

def _bn_stats_kernel(x_ref, sum_ref, sq_ref):
    x = x_ref[...]                                  # (1, tr, tc) f32
    s = jnp.sum(x, axis=1, keepdims=True)           # (1, 1, tc)
    q = jnp.sum(x * x, axis=1, keepdims=True)

    @pl.when(pl.program_id(2) == 0)
    def _():
        sum_ref[...] = s
        sq_ref[...] = q

    @pl.when(pl.program_id(2) > 0)
    def _():
        sum_ref[...] += s
        sq_ref[...] += q


def _bn_apply_kernel(*refs, rows, eps, relu, has_residual):
    if has_residual:
        x_ref, sum_ref, sq_ref, g_ref, b_ref, res_ref, o_ref = refs
    else:
        x_ref, sum_ref, sq_ref, g_ref, b_ref, o_ref = refs
    n = jnp.float32(rows)
    mean = sum_ref[...] / n                                         # (1, 1, tc)
    var = jnp.maximum(sq_ref[...] / n - mean * mean, 0.0)           # biased var (training BN)
    scale = g_ref[...] * jax.lax.rsqrt(var + eps)
    shift = b_ref[...] - mean * scale
    y = x_ref[...] * scale + shift
    if has_residual:
        y = y + res_ref[...].astype(jnp.float32)
    if relu:
        y = jnp.maximum(y, 0.0)
    o_ref[...] = y.astype(o_ref.dtype)


@partial(jax.jit, static_argnames=("views", "relu"))
def pallas_batchnorm(x, gamma, beta, *, views, relu, residual=None,
                     out_dtype=jnp.bfloat16, eps=1e-5):
    """Training-mode BatchNorm over rows of (R, C) with separate batch statistics per
    `view` (rows are view-major), optional fused residual add and ReLU.  Output bf16."""
    R, C = x.shape
    assert R % views == 0
    Rv = R // views

    tr, Rvp = _pick_tile(Rv, 8, 512)
    tc, Cp = _pick_tile(C, 128, 512)

    x3 = x.astype(jnp.float32).reshape(views, Rv, C)
    g = gamma.reshape(1, 1, C).astype(jnp.float32)
    b = beta.reshape(1, 1, C).astype(jnp.float32)
    res3 = None if residual is None else residual.reshape(views, Rv, C)
    if (Rvp, Cp) != (Rv, C):
        x3 = jnp.pad(x3, ((0, 0), (0, Rvp - Rv), (0, Cp - C)))
        g = jnp.pad(g, ((0, 0), (0, 0), (0, Cp - C)))
        b = jnp.pad(b, ((0, 0), (0, 0), (0, Cp - C)))
        if res3 is not None:
            res3 = jnp.pad(res3, ((0, 0), (0, Rvp - Rv), (0, Cp - C)))
    nr, nc = Rvp // tr, Cp // tc

    # Pass 1: per-view per-channel sum / sum^2, accumulated over row tiles.
    sums, sqs = pl.pallas_call(
        _bn_stats_kernel,
        grid=(views, nc, nr),
        in_specs=[pl.BlockSpec((1, tr, tc), lambda v, j, i: (v, i, j))],
        out_specs=[
            pl.BlockSpec((1, 1, tc), lambda v, j, i: (v, 0, j)),
            pl.BlockSpec((1, 1, tc), lambda v, j, i: (v, 0, j)),
        ],
        out_shape=[
            jax.ShapeDtypeStruct((views, 1, Cp), jnp.float32),
            jax.ShapeDtypeStruct((views, 1, Cp), jnp.float32),
        ],
        compiler_params=_cparams(("parallel", "parallel", "arbitrary")),
    )(x3)

    # Pass 2: normalize + affine (+ residual) (+ ReLU), tiled over rows and channels.
    has_res = res3 is not None
    in_specs = [
        pl.BlockSpec((1, tr, tc), lambda v, i, j: (v, i, j)),
        pl.BlockSpec((1, 1, tc), lambda v, i, j: (v, 0, j)),
        pl.BlockSpec((1, 1, tc), lambda v, i, j: (v, 0, j)),
        pl.BlockSpec((1, 1, tc), lambda v, i, j: (0, 0, j)),
        pl.BlockSpec((1, 1, tc), lambda v, i, j: (0, 0, j)),
    ]
    args = [x3, sums, sqs, g, b]
    if has_res:
        in_specs.append(pl.BlockSpec((1, tr, tc), lambda v, i, j: (v, i, j)))
        args.append(res3)

    y = pl.pallas_call(
        partial(_bn_apply_kernel, rows=Rv, eps=eps, relu=relu, has_residual=has_res),
        grid=(views, nr, nc),
        in_specs=in_specs,
        out_specs=pl.BlockSpec((1, tr, tc), lambda v, i, j: (v, i, j)),
        out_shape=jax.ShapeDtypeStruct((views, Rvp, Cp), out_dtype),
        compiler_params=_cparams(("parallel", "parallel", "parallel")),
    )(*args)
    if (Rvp, Cp) != (Rv, C):
        y = y[:, :Rv, :C]
    return y.reshape(R, C)


# ------------------------------ fused projector ------------------------------

def _projector_kernel(*refs, n_hidden, eps, normalize):
    f_ref = refs[0]
    o_ref = refs[-1]
    w_last_ref = refs[-2]

    x = f_ref[...]                                           # (M, D0) bf16
    for l in range(n_hidden):
        w_ref, b_ref, g_ref, be_ref = refs[1 + 4 * l: 1 + 4 * (l + 1)]
        h = jnp.dot(x, w_ref[...], preferred_element_type=jnp.float32) + b_ref[...]
        mean = jnp.mean(h, axis=0, keepdims=True)
        var = jnp.maximum(jnp.mean(h * h, axis=0, keepdims=True) - mean * mean, 0.0)
        h = (h - mean) * jax.lax.rsqrt(var + eps) * g_ref[...] + be_ref[...]
        x = jnp.maximum(h, 0.0).astype(jnp.bfloat16)
    z = jnp.dot(x, w_last_ref[...], preferred_element_type=jnp.float32)  # bias=False
    if normalize:
        norm = jnp.sqrt(jnp.sum(z * z, axis=1, keepdims=True))
        z = z / jnp.maximum(norm, 1e-12)       # F.normalize(p=2, dim=1, eps=1e-12)
    o_ref[...] = z


@partial(jax.jit, static_argnames=("normalize",))
def pallas_projector(feat, proj, *, normalize):
    """Whole projector (Linear+BN+ReLU stack, bias-free Linear, optional L2 normalize)
    as ONE pallas_call — all weights fit VMEM and M is tiny."""
    M, D = feat.shape
    layers = proj["layers"]
    n_hidden = len(layers)

    args = [feat.astype(jnp.bfloat16)]
    specs = [_full_spec((M, D))]
    for layer in layers:
        W = layer["W"].astype(jnp.bfloat16)
        bias = layer["b"].reshape(1, -1).astype(jnp.float32)
        g = layer["gamma"].reshape(1, -1).astype(jnp.float32)
        be = layer["beta"].reshape(1, -1).astype(jnp.float32)
        for arr in (W, bias, g, be):
            args.append(arr)
            specs.append(_full_spec(arr.shape))
    w_last = proj["W_last"].astype(jnp.bfloat16)
    args.append(w_last)
    specs.append(_full_spec(w_last.shape))
    out_dim = w_last.shape[1]

    return pl.pallas_call(
        partial(_projector_kernel, n_hidden=n_hidden, eps=1e-5, normalize=normalize),
        grid=(1,),
        in_specs=specs,
        out_specs=pl.BlockSpec((M, out_dim), lambda i: (0, 0)),
        out_shape=jax.ShapeDtypeStruct((M, out_dim), jnp.float32),
        compiler_params=_cparams(("arbitrary",)),
    )(*args)


# --------------------------- conv / pooling glue ----------------------------

def conv2d(x, w, *, stride, pad):
    """x: (N,H,W,Cin) NHWC bf16, w: (KH,KW,Cin,Cout).  == nn.Conv2d(bias=False); f32 out."""
    N, H, W, Cin = x.shape
    KH, KW, _, Cout = w.shape
    if KH == 1 and KW == 1:
        # Direct path: no im2col / concatenate at all (bulk of ResNet-50 layers).
        if stride > 1:
            x = x[:, ::stride, ::stride, :]
        N, OH, OW, _ = x.shape
        out = pallas_matmul(x.reshape(N * OH * OW, Cin), w.reshape(Cin, Cout))
        return out.reshape(N, OH, OW, Cout)
    # TODO(synk): 3x3/7x7 convs still materialize im2col patches in HBM (now in bf16, so at
    # half the previous f32 traffic); a direct Pallas conv with in-kernel tap accumulation
    # would remove the remaining KH*KW read amplification.
    xp = jnp.pad(x, ((0, 0), (pad, pad), (pad, pad), (0, 0)))
    OH = (H + 2 * pad - KH) // stride + 1
    OW = (W + 2 * pad - KW) // stride + 1
    cols = []
    for i in range(KH):
        for j in range(KW):
            cols.append(xp[:, i:i + (OH - 1) * stride + 1:stride,
                           j:j + (OW - 1) * stride + 1:stride, :])
    patches = jnp.concatenate(cols, axis=-1).reshape(N * OH * OW, KH * KW * Cin)
    out = pallas_matmul(patches, w.reshape(KH * KW * Cin, Cout))
    return out.reshape(N, OH, OW, Cout)


def batchnorm2d(x, bn, *, views, relu, residual=None):
    N, H, W, C = x.shape
    res2 = None if residual is None else residual.reshape(N * H * W, C)
    y = pallas_batchnorm(x.reshape(N * H * W, C), bn["gamma"], bn["beta"],
                         views=views, relu=relu, residual=res2)
    return y.reshape(N, H, W, C)


def maxpool_3x3_s2(x):
    # TODO(synk): max-pool kept as lax.reduce_window glue (single small op, not a Pallas kernel)
    return jax.lax.reduce_window(
        x, jnp.array(-jnp.inf, x.dtype), jax.lax.max,
        window_dimensions=(1, 3, 3, 1), window_strides=(1, 2, 2, 1),
        padding=((0, 0), (1, 1), (1, 1), (0, 0)))


# ------------------------------ parameter init ------------------------------

STAGE_CFG = [(64, 3, 1), (128, 4, 2), (256, 6, 2), (512, 3, 2)]  # resnet50 (v1.5)


def _conv_init(key, kh, kw, cin, cout):
    fan_in = kh * kw * cin
    return jax.random.normal(key, (kh, kw, cin, cout), jnp.float32) * (1.0 / math.sqrt(fan_in))


def _bn_init(c, zero_gamma=False):
    return {"gamma": (jnp.zeros((c,), jnp.float32) if zero_gamma else jnp.ones((c,), jnp.float32)),
            "beta": jnp.zeros((c,), jnp.float32)}


def init_resnet50(key):
    """torchvision resnet50 architecture (stride in 3x3), fc = Identity."""
    params = {}
    key, k = jax.random.split(key)
    params["conv1"] = _conv_init(k, 7, 7, 3, 64)
    params["bn1"] = _bn_init(64)
    in_ch = 64
    stages = []
    for planes, n_blocks, stride in STAGE_CFG:
        blocks = []
        for b in range(n_blocks):
            s = stride if b == 0 else 1
            key, k1, k2, k3, k4 = jax.random.split(key, 5)
            blk = {
                "conv1": _conv_init(k1, 1, 1, in_ch, planes),
                "bn1": _bn_init(planes),
                "conv2": _conv_init(k2, 3, 3, planes, planes),
                "bn2": _bn_init(planes),
                "conv3": _conv_init(k3, 1, 1, planes, planes * 4),
                "bn3": _bn_init(planes * 4, zero_gamma=True),  # zero_init_residual=True
            }
            if s != 1 or in_ch != planes * 4:
                blk["down_conv"] = _conv_init(k4, 1, 1, in_ch, planes * 4)
                blk["down_bn"] = _bn_init(planes * 4)
            blocks.append(blk)
            in_ch = planes * 4
        stages.append(blocks)
    params["stages"] = stages
    return params, key


def init_projector(key, sizes):
    layers = []
    for i in range(len(sizes) - 2):
        key, k1, k2 = jax.random.split(key, 3)
        layers.append({
            "W": jax.random.normal(k1, (sizes[i], sizes[i + 1]), jnp.float32) / math.sqrt(sizes[i]),
            "b": 0.01 * jax.random.normal(k2, (sizes[i + 1],), jnp.float32),
            "gamma": jnp.ones((sizes[i + 1],), jnp.float32),
            "beta": jnp.zeros((sizes[i + 1],), jnp.float32),
        })
    key, k = jax.random.split(key)
    w_last = jax.random.normal(k, (sizes[-2], sizes[-1]), jnp.float32) / math.sqrt(sizes[-2])
    return {"layers": layers, "W_last": w_last}, key


# --------------------------------- forward ----------------------------------

def bottleneck(x, blk, *, stride, views):
    identity = x
    out = conv2d(x, blk["conv1"], stride=1, pad=0)
    out = batchnorm2d(out, blk["bn1"], views=views, relu=True)
    out = conv2d(out, blk["conv2"], stride=stride, pad=1)
    out = batchnorm2d(out, blk["bn2"], views=views, relu=True)
    out = conv2d(out, blk["conv3"], stride=1, pad=0)
    if "down_conv" in blk:
        identity = conv2d(x, blk["down_conv"], stride=stride, pad=0)
        identity = batchnorm2d(identity, blk["down_bn"], views=views, relu=False)
    # bn3 + residual add + ReLU fused in one kernel.
    return batchnorm2d(out, blk["bn3"], views=views, relu=True, residual=identity)


def backbone_forward(params, y_nchw, *, views):
    x = jnp.transpose(y_nchw, (0, 2, 3, 1)).astype(jnp.bfloat16)  # NCHW -> NHWC, bf16
    x = conv2d(x, params["conv1"], stride=2, pad=3)
    x = batchnorm2d(x, params["bn1"], views=views, relu=True)
    x = maxpool_3x3_s2(x)
    for stage_idx, (_, n_blocks, stage_stride) in enumerate(STAGE_CFG):
        for b in range(n_blocks):
            s = stage_stride if b == 0 else 1
            x = bottleneck(x, params["stages"][stage_idx][b], stride=s, views=views)
    # adaptive avg pool (1,1) + flatten; backbone.fc = Identity
    return jnp.mean(x.astype(jnp.float32), axis=(1, 2))


def cov_model2_forward(params, y1, y2, *, normalized):
    # Note: self.bn (affine=False) in the PyTorch module is never used in forward -> omitted.
    views = 2
    B = y1.shape[0]
    # Run both views as ONE batch through the backbone (shared conv matmuls), but keep
    # BatchNorm training statistics per-view so semantics == two separate backbone() calls.
    y = jnp.concatenate([y1, y2], axis=0)
    feat = backbone_forward(params["backbone"], y, views=views)
    # Projector is tiny -> one fused kernel per view (preserves per-call BatchNorm1d stats).
    z1 = pallas_projector(feat[:B], params["projector"], normalize=normalized)
    z2 = pallas_projector(feat[B:], params["projector"], normalize=normalized)
    return z1, z2


if __name__ == "__main__":
    # args: model_name='resnet50', dataset='imagenet', projector='256-256-128', normalize_on=True
    projector_str = "256-256-128"
    sizes = [2048] + list(map(int, projector_str.split("-")))
    normalize_on = True

    key = jax.random.PRNGKey(0)
    backbone_params, key = init_resnet50(key)
    projector_params, key = init_projector(key, sizes)
    params = {"backbone": backbone_params, "projector": projector_params}

    key, k1, k2 = jax.random.split(key, 3)
    y1 = jax.random.normal(k1, (2, 3, 32, 32), jnp.float32)  # NCHW like PyTorch
    y2 = jax.random.normal(k2, (2, 3, 32, 32), jnp.float32)

    z1, z2 = cov_model2_forward(params, y1, y2, normalized=normalize_on)
    z1 = jax.block_until_ready(z1)
    z2 = jax.block_until_ready(z2)
    assert z1.shape == (2, sizes[-1]) and z2.shape == (2, sizes[-1])
    assert bool(jnp.all(jnp.isfinite(z1))) and bool(jnp.all(jnp.isfinite(z2)))
    print("KERNEL_OK")
</pallas_src>

<mosaic_0001>
module attributes {stable_mosaic.version = 11 : i64} {
  func.func @_matmul_kernel(%arg0: i32, %arg1: i32, %arg2: i32, %arg3: memref<256x147xbf16, #tpu.memory_space<vmem>>, %arg4: memref<147x64xbf16, #tpu.memory_space<vmem>>, %arg5: memref<256x64xf32, #tpu.memory_space<vmem>>, %arg6: memref<256x64xf32, #tpu.memory_space<vmem>>) attributes {dimension_semantics = [#tpu.dimension_semantics<parallel>, #tpu.dimension_semantics<parallel>, #tpu.dimension_semantics<arbitrary>], iteration_bounds = array<i64: 4, 1, 1>, scalar_prefetch = 0 : i64, scratch_operands = 1 : i64, tpu.core_type = #tpu.core_type<tc>, window_params = [{transform_indices = @transform_0, window_bounds = array<i64: 256, 147>}, {transform_indices = @transform_1, window_bounds = array<i64: 147, 64>}, {transform_indices = @transform_2, window_bounds = array<i64: 256, 64>}]} {
    %c0_i32 = arith.constant 0 : i32
    %0 = arith.cmpi eq, %arg2, %c0_i32 : i32
    %1 = arith.extui %0 : i1 to i32
    %c0_i32_0 = arith.constant 0 : i32
    %2 = arith.cmpi ne, %1, %c0_i32_0 : i32
    scf.if %2 {
      %cst_10 = arith.constant 0.000000e+00 : f32
      %12 = vector.broadcast %cst_10 : f32 to vector<256x64xf32>
      %c0_11 = arith.constant 0 : index
      %c0_12 = arith.constant 0 : index
      %13 = vector.load %arg6[%c0_11, %c0_12] : memref<256x64xf32, #tpu.memory_space<vmem>>, vector<256x64xf32>
      tpu.vector_store %arg6[%c0_11, %c0_12], %12 {strides = array<i32>} : memref<256x64xf32, #tpu.memory_space<vmem>>, vector<256x64xf32>,
    } else {
    }
    %c0 = arith.constant 0 : index
    %c0_1 = arith.constant 0 : index
    %3 = vector.load %arg6[%c0, %c0_1] : memref<256x64xf32, #tpu.memory_space<vmem>>, vector<256x64xf32>
    %c0_2 = arith.constant 0 : index
    %c0_3 = arith.constant 0 : index
    %4 = vector.load %arg3[%c0_2, %c0_3] : memref<256x147xbf16, #tpu.memory_space<vmem>>, vector<256x147xbf16>
    %c0_4 = arith.constant 0 : index
    %c0_5 = arith.constant 0 : index
    %5 = vector.load %arg4[%c0_4, %c0_5] : memref<147x64xbf16, #tpu.memory_space<vmem>>, vector<147x64xbf16>
    %cst = arith.constant dense<0.000000e+00> : vector<256x64xf32>
    %6 = tpu.matmul %4, %5, %cst {dimension_numbers = #tpu.dot_dimension_numbers<[1], [0], [0], [1], [0, 0, 1, 1], [], []>} : vector<256x147xbf16>, vector<147x64xbf16>, vector<256x64xf32> -> vector<256x64xf32>
    %7 = arith.addf %3, %6 : vector<256x64xf32>
    %c0_6 = arith.constant 0 : index
    %c0_7 = arith.constant 0 : index
    %8 = vector.load %arg6[%c0_6, %c0_7] : memref<256x64xf32, #tpu.memory_space<vmem>>, vector<256x64xf32>
    tpu.vector_store %arg6[%c0_6, %c0_7], %7 {strides = array<i32>} : memref<256x64xf32, #tpu.memory_space<vmem>>, vector<256x64xf32>,
    %c0_i32_8 = arith.constant 0 : i32
    %9 = arith.cmpi eq, %arg2, %c0_i32_8 : i32
    %10 = arith.extui %9 : i1 to i32
    %c0_i32_9 = arith.constant 0 : i32
    %11 = arith.cmpi ne, %10, %c0_i32_9 : i32
    scf.if %11 {
      %c0_10 = arith.constant 0 : index
      %c0_11 = arith.constant 0 : index
      %12 = vector.load %arg6[%c0_10, %c0_11] : memref<256x64xf32, #tpu.memory_space<vmem>>, vector<256x64xf32>
      %c0_12 = arith.constant 0 : index
      %c0_13 = arith.constant 0 : index
      %13 = vector.load %arg5[%c0_12, %c0_13] : memref<256x64xf32, #tpu.memory_space<vmem>>, vector<256x64xf32>
      tpu.vector_store %arg5[%c0_12, %c0_13], %12 {strides = array<i32>} : memref<256x64xf32, #tpu.memory_space<vmem>>, vector<256x64xf32>,
    } else {
    }
    return
  }
  func.func @transform_0(%arg0: i32, %arg1: i32, %arg2: i32) -> (i32, i32) {
    %c0_i32 = arith.constant 0 : i32
    return %arg0, %arg2 : i32, i32
  }
  func.func @transform_1(%arg0: i32, %arg1: i32, %arg2: i32) -> (i32, i32) {
    %c0_i32 = arith.constant 0 : i32
    return %arg2, %arg1 : i32, i32
  }
  func.func @transform_2(%arg0: i32, %arg1: i32, %arg2: i32) -> (i32, i32) {
    %c0_i32 = arith.constant 0 : i32
    return %arg0, %arg1 : i32, i32
  }
}

</mosaic_0001>

<llo_original>
// kernel: pallas_matmul.1
$region0: #{pallas_matmul.1}
  #allocation0 [shape = 'u32[]', space=smem, size = 0x4, offset = 0x4, fixed_abs, tag = 'smem constant byte address 0x4 - core index']
  #allocation1 [shape = 'u32[144,128]{1,0:T(1,128)}', space=vmem, size = 0x12000, scoped, tag = 'internal scratch']
  #allocation2 [shape = 'f32[256,64]{1,0:T(8,128)}', space=vmem, size = 0x20000, scoped, tag = 'scratch operand']
  %s0 = inlined_call_operand.vmem [shape: bf16[1024,147], index: 0, kind: input, shape index: {}]
  %s1 = inlined_call_operand.vmem [shape: bf16[147,64], index: 1, kind: input, shape index: {}]
  %s2 = inlined_call_operand.vmem [shape: f32[1024,64], index: 2, kind: output, shape index: {}]
  %s3 = sld [smem:[#allocation0]]
  $region49: #{pallas_matmul.1} parent=0
    _
  %s5 = ssub.s32 1, %s3
  %s6 = scalar_select 0, %s5, %s3
  loop: start=0, step=1, limit=6
  $region2: #{pallas_matmul.1} parent=0 // loop_pre_header
    _
  $region3: #{pallas_matmul.1} parent=0 // loop_header
    %s8 = sphi 0, %s12
    %p9 = scmp.ge.s32.totalorder %s8, 6
    %s15 = sphi 0, %s34
    %s16 = sphi 0, %s30
    %s17 = sphi 0, %s26
    %s18 = sphi 0, %s15
    %s19 = sphi 0, %s16
    %s20 = sphi 0, %s17
    %s21 = sphi 0, %s18
    %s22 = sphi 0, %s19
    %s23 = sphi 0, %s20
    %s39 = sphi 0, %s41
    %s42 = sphi 0, %s39
    %s43 = sphi 0, %s42
    %s59 = sphi 0, %s43
    %s67 = sphi 0, %s69
    %s70 = sphi 0, %s67
    %s71 = sphi 0, %s70
    %s87 = sphi 0, %s71
    %s95 = sphi 0, %s97
    %s98 = sphi 0, %s95
    %s99 = sphi 0, %s98
    %s115 = sphi 0, %s99
  $region4: #{pallas_matmul.1} parent=0 // loop_header_branch
    %11 = sbr.rel (%p9) target = $region8
  $region5: #{pallas_matmul.1} parent=0 // loop_body
    %s13 = ssub.s32 %s8, 1
    %s14 = ssub.s32 %s8, 2
    %s24 = sadd.s32 1, %s17
    %p25 = scmp.ge.s32.totalorder %s24, 1
    %s26 = scalar_select %p25, 0, %s24
    %s27 = sadd.s32 1, %s16
    %s28 = scalar_select %p25, %s27, %s16
    %p29 = scmp.ge.s32.totalorder %s28, 1
    %s30 = scalar_select %p29, 0, %s28
    %s31 = sadd.s32 1, %s15
    %s32 = scalar_select %p29, %s31, %s15
    %p33 = scmp.ge.s32.totalorder %s32, 4
    %s34 = scalar_select %p33, 0, %s32
    %s35 = ssub.s32 %s15, %s34
    %s36 = ssub.s32 %s17, %s26
    %s37 = sor.u32 %s35, %s36
    %p38 = scmp.eq.s32.totalorder %s37, 0
    %s40 = sadd.s32 %s39, 1
    %s41 = scalar_select %p38, %s39, %s40
    %p44 = pneg %p38
    %p45 = scmp.eq.s32.totalorder %s8, 3
    %p46 = por %p44, %p45
    %p47 = scmp.ne.s32.totalorder %s39, %s42
    %p48 = scmp.eq.s32.totalorder %s8, 0
    %p49 = por %p47, %p48
    %p50 = scmp.ne.s32.totalorder %s39, %s42
    %p51 = scmp.eq.s32.totalorder %s13, 3
    %p52 = por %p50, %p51
    %p53 = scmp.ne.s32.totalorder %s42, %s43
    %p54 = scmp.eq.s32.totalorder %s13, 0
    %p55 = por %p53, %p54
    %p56 = scmp.ne.s32.totalorder %s42, %s43
    %p57 = scmp.eq.s32.totalorder %s14, 3
    %p58 = por %p56, %p57
    %p60 = scmp.ne.s32.totalorder %s43, %s59
    %p61 = scmp.eq.s32.totalorder %s14, 0
    %p62 = por %p60, %p61
    %s63 = ssub.s32 %s17, %s26
    %s64 = ssub.s32 %s16, %s30
    %s65 = sor.u32 %s63, %s64
    %p66 = scmp.eq.s32.totalorder %s65, 0
    %s68 = sadd.s32 %s67, 1
    %s69 = scalar_select %p66, %s67, %s68
    %p72 = pneg %p66
    %p73 = scmp.eq.s32.totalorder %s8, 3
    %p74 = por %p72, %p73
    %p75 = scmp.ne.s32.totalorder %s67, %s70
    %p76 = scmp.eq.s32.totalorder %s8, 0
    %p77 = por %p75, %p76
    %p78 = scmp.ne.s32.totalorder %s67, %s70
    %p79 = scmp.eq.s32.totalorder %s13, 3
    %p80 = por %p78, %p79
    %p81 = scmp.ne.s32.totalorder %s70, %s71
    %p82 = scmp.eq.s32.totalorder %s13, 0
    %p83 = por %p81, %p82
    %p84 = scmp.ne.s32.totalorder %s70, %s71
    %p85 = scmp.eq.s32.totalorder %s14, 3
    %p86 = por %p84, %p85
    %p88 = scmp.ne.s32.totalorder %s71, %s87
    %p89 = scmp.eq.s32.totalorder %s14, 0
    %p90 = por %p88, %p89
    %s91 = ssub.s32 %s15, %s34
    %s92 = ssub.s32 %s16, %s30
    %s93 = sor.u32 %s91, %s92
    %p94 = scmp.eq.s32.totalorder %s93, 0
    %s96 = sadd.s32 %s95, 1
    %s97 = scalar_select %p94, %s95, %s96
    %p100 = pneg %p94
    %p101 = scmp.eq.s32.totalorder %s8, 3
    %p102 = por %p100, %p101
    %p103 = scmp.ne.s32.totalorder %s95, %s98
    %p104 = scmp.eq.s32.totalorder %s8, 0
    %p105 = por %p103, %p104
    %p106 = scmp.ne.s32.totalorder %s95, %s98
    %p107 = scmp.eq.s32.totalorder %s13, 3
    %p108 = por %p106, %p107
    %p109 = scmp.ne.s32.totalorder %s98, %s99
    %p110 = scmp.eq.s32.totalorder %s13, 0
    %p111 = por %p109, %p110
    %p112 = scmp.ne.s32.totalorder %s98, %s99
    %p113 = scmp.eq.s32.totalorder %s14, 3
    %p114 = por %p112, %p113
    %p116 = scmp.ne.s32.totalorder %s99, %s115
    %p117 = scmp.eq.s32.totalorder %s14, 0
    %p118 = por %p116, %p117
    %p119 = scmp.le.s32.totalorder 1, %s8
    %p120 = scmp.lt.s32.totalorder %s8, 5
    %p121 = pnand %p119, %p120
    %p122 = pneg %p121
    // Predicated region
    $region9: #{pallas_matmul.1} parent=5 // pred_check
      _
    $region10: #{pallas_matmul.1} parent=5 // pred_check_branch
      %124 = sbr.rel (%p121) target = $region12
    $region11: #{pallas_matmul.1} parent=5 // pred_region
      %s125 = ssub.s32 %s8, 1
      // Predicated region
      $region13: #{pallas_matmul.1} parent=11 // pred_check
        %p126 = pneg %p83
      $region14: #{pallas_matmul.1} parent=11 // pred_check_branch
        %128 = sbr.rel (%p126) target = $region16
      $region15: #{pallas_matmul.1} parent=11 // pred_region
        %s129 = smul.u32 19, %s20
        %p130 = scmp.lt.s32.totalorder %s129, 18
        %s131 = scalar_select %p130, %s129, 18
        %p132 = scmp.lt.s32.totalorder %s19, 0
        %s133 = scalar_select %p132, %s19, 0
        %s134 = sadd.s32 %s133, %s131
        %s135 = smul.addr %s134, 4
        %s136 = scalar_lea.vmem %s1, %s135
        %s137 = smul.u32 19, %s20
      $region16: #{pallas_matmul.1} parent=11 // pred_fallthru
        _
    $region12: #{pallas_matmul.1} parent=5 // pred_fallthru
      _
    %p138 = scmp.lt.s32.totalorder %s8, 4
    // Predicated region
    $region17: #{pallas_matmul.1} parent=5 // pred_check
      %p139 = pneg %p138
    $region18: #{pallas_matmul.1} parent=5 // pred_check_branch
      %141 = sbr.rel (%p139) target = $region20
    $region19: #{pallas_matmul.1} parent=5 // pred_region
      // Predicated region
      $region21: #{pallas_matmul.1} parent=19 // pred_check
        %p142 = pneg %p49
      $region22: #{pallas_matmul.1} parent=19 // pred_check_branch
        %144 = sbr.rel (%p142) target = $region24
      $region23: #{pallas_matmul.1} parent=19 // pred_region
        %s145 = smul.u32 32, %s15
        %s146 = smul.u32 2, %s17
        %p147 = scmp.lt.s32.totalorder %s145, 127
        %s148 = scalar_select %p147, %s145, 127
        %p149 = scmp.lt.s32.totalorder %s146, 1
        %s150 = scalar_select %p149, %s146, 1
        %s151 = smul.addr %s148, 2
        %s152 = sadd.s32 %s150, %s151
        %s153 = smul.addr %s152, 4
        %s154 = scalar_lea.vmem %s0, %s153
        %s155 = smul.u32 32, %s15
        %s156 = smul.u32 2, %s17
      $region24: #{pallas_matmul.1} parent=19 // pred_fallthru
        _
    $region20: #{pallas_matmul.1} parent=5 // pred_fallthru
      _
    %p157 = scmp.le.s32.totalorder 1, %s8
    %p158 = scmp.lt.s32.totalorder %s8, 5
    %p159 = pnand %p157, %p158
    %p160 = pneg %p159
    // Predicated region
    $region25: #{pallas_matmul.1} parent=5 // pred_check
      _
    $region26: #{pallas_matmul.1} parent=5 // pred_check_branch
      %162 = sbr.rel (%p159) target = $region28
    $region27: #{pallas_matmul.1} parent=5 // pred_region
      %s163 = ssub.s32 %s8, 1
      %s164 = smul.u32 32, %s18
      %s165 = smul.u32 2, %s20
      %p166 = scmp.lt.s32.totalorder %s164, 127
      %s167 = scalar_select %p166, %s164, 127
      %p168 = scmp.lt.s32.totalorder %s165, 1
      %s169 = scalar_select %p168, %s165, 1
      %s170 = smul.addr %s167, 2
      %s171 = sadd.s32 %s169, %s170
      %s172 = smul.addr %s171, 4
      %s173 = scalar_lea.vmem %s0, %s172
      %p174 = pneg %p55
      %p175 = pneg %p52
      %s176 = smul.u32 19, %s20
      %p177 = scmp.lt.s32.totalorder %s176, 18
      %s178 = scalar_select %p177, %s176, 18
      %p179 = scmp.lt.s32.totalorder %s19, 0
      %s180 = scalar_select %p179, %s19, 0
      %s181 = sadd.s32 %s180, %s178
      %s182 = smul.addr %s181, 4
      %s183 = scalar_lea.vmem %s1, %s182
      %p184 = pneg %p83
      %p185 = pneg %p80
      %p186 = pneg %p111
      %p187 = pneg %p108
      %s188 = smul.u32 32, %s18
      %p189 = scmp.lt.s32.totalorder %s188, 127
      %s190 = scalar_select %p189, %s188, 127
      %p191 = scmp.lt.s32.totalorder %s19, 0
      %s192 = scalar_select %p191, %s19, 0
      %s193 = sadd.s32 %s192, %s190
      %s194 = smul.addr %s193, 8
      %s195 = scalar_lea.vmem %s2, %s194
      %s196 = smul.u32 32, %s18
      %s197 = smul.u32 2, %s20
      %p198 = scmp.lt.s32.totalorder %s196, 127
      %s199 = scalar_select %p198, %s196, 127
      %p200 = scmp.lt.s32.totalorder %s197, 1
      %s201 = scalar_select %p200, %s197, 1
      %s202 = smul.addr %s199, 2
      %s203 = sadd.s32 %s201, %s202
      %s204 = smul.addr %s203, 4
      %s205 = scalar_lea.vmem %s0, %s204
      %s206 = smul.u32 32, %s18
      %s207 = smul.u32 2, %s20
      %s208 = smul.u32 19, %s20
      %p209 = scmp.lt.s32.totalorder %s208, 18
      %s210 = scalar_select %p209, %s208, 18
      %p211 = scmp.lt.s32.totalorder %s19, 0
      %s212 = scalar_select %p211, %s19, 0
      %s213 = sadd.s32 %s212, %s210
      %s214 = smul.addr %s213, 4
      %s215 = scalar_lea.vmem %s1, %s214
      %s216 = smul.u32 19, %s20
      %s217 = smul.u32 32, %s18
      %p218 = scmp.lt.s32.totalorder %s217, 127
      %s219 = scalar_select %p218, %s217, 127
      %p220 = scmp.lt.s32.totalorder %s19, 0
      %s221 = scalar_select %p220, %s19, 0
      %s222 = sadd.s32 %s221, %s219
      %s223 = smul.addr %s222, 8
      %s224 = scalar_lea.vmem %s2, %s223
      %s225 = smul.u32 32, %s18
      %p227 = scmp.eq.s32.totalorder %s20, 0
      // Predicated region
      $region29: #{pallas_matmul.1} parent=27 // pred_check
        %p228 = pneg %p227
      $region30: #{pallas_matmul.1} parent=27 // pred_check_branch
        %230 = sbr.rel (%p228) target = $region32
      $region31: #{pallas_matmul.1} parent=27 // pred_region
        %vm231 = vcmask 523264
        %232 = vst.msk [vmem:[#allocation2] sm:$0xff] %vm231, 0.0
        %233 = vst.msk [vmem:[#allocation2 + $0x8] sm:$0xff] %vm231, 0.0
        %234 = vst.msk [vmem:[#allocation2 + $0x10] sm:$0xff] %vm231, 0.0
        %235 = vst.msk [vmem:[#allocation2 + $0x18] sm:$0xff] %vm231, 0.0
        %236 = vst.msk [vmem:[#allocation2 + $0x20] sm:$0xff] %vm231, 0.0
        %237 = vst.msk [vmem:[#allocation2 + $0x28] sm:$0xff] %vm231, 0.0
        %238 = vst.msk [vmem:[#allocation2 + $0x30] sm:$0xff] %vm231, 0.0
        %239 = vst.msk [vmem:[#allocation2 + $0x38] sm:$0xff] %vm231, 0.0
        %240 = vst.msk [vmem:[#allocation2 + $0x40] sm:$0xff] %vm231, 0.0
        %241 = vst.msk [vmem:[#allocation2 + $0x48] sm:$0xff] %vm231, 0.0
        %242 = vst.msk [vmem:[#allocation2 + $0x50] sm:$0xff] %vm231, 0.0
        %243 = vst.msk [vmem:[#allocation2 + $0x58] sm:$0xff] %vm231, 0.0
        %244 = vst.msk [vmem:[#allocation2 + $0x60] sm:$0xff] %vm231, 0.0
        %245 = vst.msk [vmem:[#allocation2 + $0x68] sm:$0xff] %vm231, 0.0
        %246 = vst.msk [vmem:[#allocation2 + $0x70] sm:$0xff] %vm231, 0.0
        %247 = vst.msk [vmem:[#allocation2 + $0x78] sm:$0xff] %vm231, 0.0
        %248 = vst.msk [vmem:[#allocation2 + $0x80] sm:$0xff] %vm231, 0.0
        %249 = vst.msk [vmem:[#allocation2 + $0x88] sm:$0xff] %vm231, 0.0
        %250 = vst.msk [vmem:[#allocation2 + $0x90] sm:$0xff] %vm231, 0.0
        %251 = vst.msk [vmem:[#allocation2 + $0x98] sm:$0xff] %vm231, 0.0
        %252 = vst.msk [vmem:[#allocation2 + $0xa0] sm:$0xff] %vm231, 0.0
        %253 = vst.msk [vmem:[#allocation2 + $0xa8] sm:$0xff] %vm231, 0.0
        %254 = vst.msk [vmem:[#allocation2 + $0xb0] sm:$0xff] %vm231, 0.0
        %255 = vst.msk [vmem:[#allocation2 + $0xb8] sm:$0xff] %vm231, 0.0
        %256 = vst.msk [vmem:[#allocation2 + $0xc0] sm:$0xff] %vm231, 0.0
        %257 = vst.msk [vmem:[#allocation2 + $0xc8] sm:$0xff] %vm231, 0.0
        %258 = vst.msk [vmem:[#allocation2 + $0xd0] sm:$0xff] %vm231, 0.0
        %259 = vst.msk [vmem:[#allocation2 + $0xd8] sm:$0xff] %vm231, 0.0
        %260 = vst.msk [vmem:[#allocation2 + $0xe0] sm:$0xff] %vm231, 0.0
        %261 = vst.msk [vmem:[#allocation2 + $0xe8] sm:$0xff] %vm231, 0.0
        %262 = vst.msk [vmem:[#allocation2 + $0xf0] sm:$0xff] %vm231, 0.0
        %263 = vst.msk [vmem:[#allocation2 + $0xf8] sm:$0xff] %vm231, 0.0
      $region32: #{pallas_matmul.1} parent=27 // pred_fallthru
        _
      %v264 = vld [vmem:[#allocation2] sm:$0xff]
      %v265 = vld [vmem:[#allocation2 + $0x8] sm:$0xff]
      %v266 = vld [vmem:[#allocation2 + $0x10] sm:$0xff]
      %v267 = vld [vmem:[#allocation2 + $0x18] sm:$0xff]
      %v268 = vld [vmem:[#allocation2 + $0x20] sm:$0xff]
      %v269 = vld [vmem:[#allocation2 + $0x28] sm:$0xff]
      %v270 = vld [vmem:[#allocation2 + $0x30] sm:$0xff]
      %v271 = vld [vmem:[#allocation2 + $0x38] sm:$0xff]
      %v272 = vld [vmem:[#allocation2 + $0x40] sm:$0xff]
      %v273 = vld [vmem:[#allocation2 + $0x48] sm:$0xff]
      %v274 = vld [vmem:[#allocation2 + $0x50] sm:$0xff]
      %v275 = vld [vmem:[#allocation2 + $0x58] sm:$0xff]
      %v276 = vld [vmem:[#allocation2 + $0x60] sm:$0xff]
      %v277 = vld [vmem:[#allocation2 + $0x68] sm:$0xff]
      %v278 = vld [vmem:[#allocation2 + $0x70] sm:$0xff]
      %v279 = vld [vmem:[#allocation2 + $0x78] sm:$0xff]
      %v280 = vld [vmem:[#allocation2 + $0x80] sm:$0xff]
      %v281 = vld [vmem:[#allocation2 + $0x88] sm:$0xff]
      %v282 = vld [vmem:[#allocation2 + $0x90] sm:$0xff]
      %v283 = vld [vmem:[#allocation2 + $0x98] sm:$0xff]
      %v284 = vld [vmem:[#allocation2 + $0xa0] sm:$0xff]
      %v285 = vld [vmem:[#allocation2 + $0xa8] sm:$0xff]
      %v286 = vld [vmem:[#allocation2 + $0xb0] sm:$0xff]
      %v287 = vld [vmem:[#allocation2 + $0xb8] sm:$0xff]
      %v288 = vld [vmem:[#allocation2 + $0xc0] sm:$0xff]
      %v289 = vld [vmem:[#allocation2 + $0xc8] sm:$0xff]
      %v290 = vld [vmem:[#allocation2 + $0xd0] sm:$0xff]
      %v291 = vld [vmem:[#allocation2 + $0xd8] sm:$0xff]
      %v292 = vld [vmem:[#allocation2 + $0xe0] sm:$0xff]
      %v293 = vld [vmem:[#allocation2 + $0xe8] sm:$0xff]
      %v294 = vld [vmem:[#allocation2 + $0xf0] sm:$0xff]
      %v295 = vld [vmem:[#allocation2 + $0xf8] sm:$0xff]
      %v296 = vld [vmem:[%s205] sm:$0xff]
      %v297 = vld [vmem:[%s205 + $0x8] sm:$0xff]
      %v298 = vld [vmem:[%s205 + $0x10] sm:$0xff]
      %v299 = vld [vmem:[%s205 + $0x18] sm:$0xff]
      %v300 = vld [vmem:[%s205 + $0x20] sm:$0xff]
      %v301 = vld [vmem:[%s205 + $0x28] sm:$0xff]
      %v302 = vld [vmem:[%s205 + $0x30] sm:$0xff]
      %v303 = vld [vmem:[%s205 + $0x38] sm:$0xff]
      %v304 = vld [vmem:[%s205 + $0x40] sm:$0xff]
      %v305 = vld [vmem:[%s205 + $0x48] sm:$0xff]
      %v306 = vld [vmem:[%s205 + $0x50] sm:$0xff]
      %v307 = vld [vmem:[%s205 + $0x58] sm:$0xff]
      %v308 = vld [vmem:[%s205 + $0x60] sm:$0xff]
      %v309 = vld [vmem:[%s205 + $0x68] sm:$0xff]
      %v310 = vld [vmem:[%s205 + $0x70] sm:$0xff]
      %v311 = vld [vmem:[%s205 + $0x78] sm:$0xff]
      %v312 = vld [vmem:[%s205 + $0x80] sm:$0xff]
      %v313 = vld [vmem:[%s205 + $0x88] sm:$0xff]
      %v314 = vld [vmem:[%s205 + $0x90] sm:$0xff]
      %v315 = vld [vmem:[%s205 + $0x98] sm:$0xff]
      %v316 = vld [vmem:[%s205 + $0xa0] sm:$0xff]
      %v317 = vld [vmem:[%s205 + $0xa8] sm:$0xff]
      %v318 = vld [vmem:[%s205 + $0xb0] sm:$0xff]
      %v319 = vld [vmem:[%s205 + $0xb8] sm:$0xff]
      %v320 = vld [vmem:[%s205 + $0xc0] sm:$0xff]
      %v321 = vld [vmem:[%s205 + $0xc8] sm:$0xff]
      %v322 = vld [vmem:[%s205 + $0xd0] sm:$0xff]
      %v323 = vld [vmem:[%s205 + $0xd8] sm:$0xff]
      %v324 = vld [vmem:[%s205 + $0xe0] sm:$0xff]
      %v325 = vld [vmem:[%s205 + $0xe8] sm:$0xff]
      %v326 = vld [vmem:[%s205 + $0xf0] sm:$0xff]
      %v327 = vld [vmem:[%s205 + $0xf8] sm:$0xff]
      %v328 = vld [vmem:[%s215] sm:$0xf]
      %v329 = vld [vmem:[%s215 + $0x4] sm:$0xf]
      %v330 = vld [vmem:[%s215 + $0x8] sm:$0xf]
      %v331 = vld [vmem:[%s215 + $0xc] sm:$0xf]
      %v332 = vld [vmem:[%s215 + $0x10] sm:$0xf]
      %v333 = vld [vmem:[%s215 + $0x14] sm:$0xf]
      %v334 = vld [vmem:[%s215 + $0x18] sm:$0xf]
      %v335 = vld [vmem:[%s215 + $0x1c] sm:$0xf]
      %v336 = vld [vmem:[%s215 + $0x20] sm:$0xf]
      %v337 = vld [vmem:[%s215 + $0x24] sm:$0xf]
      %v338 = vld [vmem:[%s215 + $0x28] sm:$0xf]
      %v339 = vld [vmem:[%s215 + $0x2c] sm:$0xf]
      %v340 = vld [vmem:[%s215 + $0x30] sm:$0xf]
      %v341 = vld [vmem:[%s215 + $0x34] sm:$0xf]
      %v342 = vld [vmem:[%s215 + $0x38] sm:$0xf]
      %v343 = vld [vmem:[%s215 + $0x3c] sm:$0xf]
      %v344 = vld [vmem:[%s215 + $0x40] sm:$0xf]
      %v345 = vld [vmem:[%s215 + $0x44] sm:$0xf]
      %v346 = vld [vmem:[%s215 + $0x48] sm:$0x3]
      %v379 = vunpack.c.l.b16 %v296
      %v380 = vunpack.c.h.b16 %v296
      %v381 = vunpack.c.l.b16 %v297
      %v382 = vunpack.c.h.b16 %v297
      %v383 = vunpack.c.l.b16 %v298
      %v384 = vunpack.c.h.b16 %v298
      %v385 = vunpack.c.l.b16 %v299
      %v386 = vunpack.c.h.b16 %v299
      %v387 = vunpack.c.l.b16 %v300
      %v388 = vunpack.c.h.b16 %v300
      %v389 = vunpack.c.l.b16 %v301
      %v390 = vunpack.c.h.b16 %v301
      %v391 = vunpack.c.l.b16 %v302
      %v392 = vunpack.c.h.b16 %v302
      %v393 = vunpack.c.l.b16 %v303
      %v394 = vunpack.c.h.b16 %v303
      %v395 = vunpack.c.l.b16 %v304
      %v396 = vunpack.c.h.b16 %v304
      %v397 = vunpack.c.l.b16 %v305
      %v398 = vunpack.c.h.b16 %v305
      %v399 = vunpack.c.l.b16 %v306
      %v400 = vunpack.c.h.b16 %v306
      %v401 = vunpack.c.l.b16 %v307
      %v402 = vunpack.c.h.b16 %v307
      %v403 = vunpack.c.l.b16 %v308
      %v404 = vunpack.c.h.b16 %v308
      %v405 = vunpack.c.l.b16 %v309
      %v406 = vunpack.c.h.b16 %v309
      %v407 = vunpack.c.l.b16 %v310
      %v408 = vunpack.c.h.b16 %v310
      %v409 = vunpack.c.l.b16 %v311
      %v410 = vunpack.c.h.b16 %v311
      %v411 = vunpack.c.l.b16 %v312
      %v412 = vunpack.c.h.b16 %v312
      %v413 = vunpack.c.l.b16 %v313
      %v414 = vunpack.c.h.b16 %v313
      %v415 = vunpack.c.l.b16 %v314
      %v416 = vunpack.c.h.b16 %v314
      %v417 = vunpack.c.l.b16 %v315
      %v418 = vunpack.c.h.b16 %v315
      %v419 = vunpack.c.l.b16 %v316
      %v420 = vunpack.c.h.b16 %v316
      %v421 = vunpack.c.l.b16 %v317
      %v422 = vunpack.c.h.b16 %v317
      %v423 = vunpack.c.l.b16 %v318
      %v424 = vunpack.c.h.b16 %v318
      %v425 = vunpack.c.l.b16 %v319
      %v426 = vunpack.c.h.b16 %v319
      %v427 = vunpack.c.l.b16 %v320
      %v428 = vunpack.c.h.b16 %v320
      %v429 = vunpack.c.l.b16 %v321
      %v430 = vunpack.c.h.b16 %v321
      %v431 = vunpack.c.l.b16 %v322
      %v432 = vunpack.c.h.b16 %v322
      %v433 = vunpack.c.l.b16 %v323
      %v434 = vunpack.c.h.b16 %v323
      %v435 = vunpack.c.l.b16 %v324
      %v436 = vunpack.c.h.b16 %v324
      %v437 = vunpack.c.l.b16 %v325
      %v438 = vunpack.c.h.b16 %v325
      %v439 = vunpack.c.l.b16 %v326
      %v440 = vunpack.c.h.b16 %v326
      %v441 = vunpack.c.l.b16 %v327
      %v442 = vunpack.c.h.b16 %v327
      %v443 = vpack.c.b16 %v381, %v379
      %v444 = vpack.c.b16 %v382, %v380
      %v445 = vpack.c.b16 %v385, %v383
      %v446 = vpack.c.b16 %v386, %v384
      %v447 = vpack.c.b16 %v389, %v387
      %v448 = vpack.c.b16 %v390, %v388
      %v449 = vpack.c.b16 %v393, %v391
      %v450 = vpack.c.b16 %v394, %v392
      %v451 = vpack.c.b16 %v397, %v395
      %v452 = vpack.c.b16 %v398, %v396
      %v453 = vpack.c.b16 %v401, %v399
      %v454 = vpack.c.b16 %v402, %v400
      %v455 = vpack.c.b16 %v405, %v403
      %v456 = vpack.c.b16 %v406, %v404
      %v457 = vpack.c.b16 %v409, %v407
      %v458 = vpack.c.b16 %v410, %v408
      %v459 = vpack.c.b16 %v413, %v411
      %v460 = vpack.c.b16 %v414, %v412
      %v461 = vpack.c.b16 %v417, %v415
      %v462 = vpack.c.b16 %v418, %v416
      %v463 = vpack.c.b16 %v421, %v419
      %v464 = vpack.c.b16 %v422, %v420
      %v465 = vpack.c.b16 %v425, %v423
      %v466 = vpack.c.b16 %v426, %v424
      %v467 = vpack.c.b16 %v429, %v427
      %v468 = vpack.c.b16 %v430, %v428
      %v469 = vpack.c.b16 %v433, %v431
      %v470 = vpack.c.b16 %v434, %v432
      %v471 = vpack.c.b16 %v437, %v435
      %v472 = vpack.c.b16 %v438, %v436
      %v473 = vpack.c.b16 %v441, %v439
      %v474 = vpack.c.b16 %v442, %v440
      %v510 = vunpack.c.l.b16 %v328
      %v511 = vunpack.c.l.b16 %v329
      %v512 = vunpack.c.l.b16 %v330
      %v513 = vunpack.c.l.b16 %v331
      %v514 = vunpack.c.l.b16 %v332
      %v515 = vunpack.c.l.b16 %v333
      %v516 = vunpack.c.l.b16 %v334
      %v517 = vunpack.c.l.b16 %v335
      %v518 = vunpack.c.l.b16 %v336
      %v519 = vunpack.c.l.b16 %v337
      %v520 = vunpack.c.l.b16 %v338
      %v521 = vunpack.c.l.b16 %v339
      %v522 = vunpack.c.l.b16 %v340
      %v523 = vunpack.c.l.b16 %v341
      %v524 = vunpack.c.l.b16 %v342
      %v525 = vunpack.c.l.b16 %v343
      %v526 = vunpack.c.l.b16 %v344
      %v527 = vunpack.c.l.b16 %v345
      %v528 = vunpack.c.l.b16 %v346
      %v529 = vpack.c.b16 %v511, %v510
      %v530 = vpack.c.b16 %v513, %v512
      %v531 = vpack.c.b16 %v515, %v514
      %v532 = vpack.c.b16 %v517, %v516
      %v533 = vpack.c.b16 %v519, %v518
      %v534 = vpack.c.b16 %v521, %v520
      %v535 = vpack.c.b16 %v523, %v522
      %v536 = vpack.c.b16 %v525, %v524
      %v537 = vpack.c.b16 %v527, %v526
      %v538 = vpack.c.b16 %v528, %v528
      %vm548 = vcmask 154624
      %v550 = vsel %vm548, %v444, 0
      %v553 = vsel %vm548, %v446, 0
      %v556 = vsel %vm548, %v448, 0
      %v559 = vsel %vm548, %v450, 0
      %v562 = vsel %vm548, %v452, 0
      %v565 = vsel %vm548, %v454, 0
      %v568 = vsel %vm548, %v456, 0
      %v571 = vsel %vm548, %v458, 0
      %v574 = vsel %vm548, %v460, 0
      %v577 = vsel %vm548, %v462, 0
      %v580 = vsel %vm548, %v464, 0
      %v583 = vsel %vm548, %v466, 0
      %v586 = vsel %vm548, %v468, 0
      %v589 = vsel %vm548, %v470, 0
      %v592 = vsel %vm548, %v472, 0
      %v595 = vsel %vm548, %v474, 0
      %vm597 = vcmask 1040384
      %vm598 = vcmask 1041408
      %v599 = vsel %vm597, 4294967295, 65535
      %v600 = vsel %vm598, %v599, 0
      %v602 = vand.u32 %v538, %v600
      %604 = vmatprep.subr.bf16.mxu0 0
      %605 = vmatpush1.bf16.msra.mxu0 %v536
      %606 = vmatprep.subr.bf16.mxu0 0
      %607 = vmatpush1.bf16.msra.mxu0 %v535
      %608 = vmatprep.subr.bf16.mxu0 0
      %609 = vmatpush1.bf16.msra.mxu0 %v534
      %610 = vmatprep.subr.bf16.mxu0 0
      %611 = vmatpush1.bf16.msra.mxu0 %v533
      %612 = vmatprep.subr.bf16.mxu0 0
      %613 = vmatpush1.bf16.msra.mxu0 %v532
      %614 = vmatprep.subr.bf16.mxu0 0
      %615 = vmatpush1.bf16.msra.mxu0 %v531
      %616 = vmatprep.subr.bf16.mxu0 0
      %617 = vmatpush1.bf16.msra.mxu0 %v530
      %618 = vmatprep.subr.bf16.mxu0 0
      %619 = vmatpush1.bf16.msra.mxu0 %v529
      %620 = vmatprep.subr.bf16.mxu0 0
      %621 = vmatpush2.bf16.msra.mxu0 0
      %622 = vmatprep.subr.bf16.mxu0 0
      %623 = vmatpush2.bf16.msra.mxu0 0
      %624 = vmatprep.subr.bf16.mxu0 0
      %625 = vmatpush2.bf16.msra.mxu0 0
      %626 = vmatprep.subr.bf16.mxu0 0
      %627 = vmatpush2.bf16.msra.mxu0 0
      %628 = vmatprep.subr.bf16.mxu0 0
      %629 = vmatpush2.bf16.msra.mxu0 0
      %630 = vmatprep.subr.bf16.mxu0 0
      %631 = vmatpush2.bf16.msra.mxu0 0
      %632 = vmatprep.subr.bf16.mxu0 0
      %633 = vmatpush2.bf16.msra.mxu0 %v602
      %634 = vmatprep.subr.bf16.mxu0 0
      %635 = vmatpush2.bf16.msra.mxu0 %v537
      %636 = vmatprep.mubr.bf16.mxu0 %v550
      %637 = vmatmul.mubr.bf16.gmra.mxu0 %v443
      %v638 = vpop.f32.mrf.mxu0
      %v639 = vadd.f32 0.0, %v638
      %v640 = vpop.f32.mrf.mxu0
      %v641 = vpop.f32.mrf.mxu0
      %v642 = vadd.f32 0.0, %v641
      %v643 = vpop.f32.mrf.mxu0
      %644 = vmatprep.mubr.bf16.mxu0 %v553
      %645 = vmatmul.mubr.bf16.gmra.mxu0 %v445
      %v646 = vpop.f32.mrf.mxu0
      %v647 = vadd.f32 0.0, %v646
      %v648 = vpop.f32.mrf.mxu0
      %v649 = vpop.f32.mrf.mxu0
      %v650 = vadd.f32 0.0, %v649
      %v651 = vpop.f32.mrf.mxu0
      %652 = vmatprep.mubr.bf16.mxu0 %v556
      %653 = vmatmul.mubr.bf16.gmra.mxu0 %v447
      %v654 = vpop.f32.mrf.mxu0
      %v655 = vadd.f32 0.0, %v654
      %v656 = vpop.f32.mrf.mxu0
      %v657 = vpop.f32.mrf.mxu0
      %v658 = vadd.f32 0.0, %v657
      %v659 = vpop.f32.mrf.mxu0
      %660 = vmatprep.mubr.bf16.mxu0 %v559
      %661 = vmatmul.mubr.bf16.gmra.mxu0 %v449
      %v662 = vpop.f32.mrf.mxu0
      %v663 = vadd.f32 0.0, %v662
      %v664 = vpop.f32.mrf.mxu0
      %v665 = vpop.f32.mrf.mxu0
      %v666 = vadd.f32 0.0, %v665
      %v667 = vpop.f32.mrf.mxu0
      %668 = vmatprep.mubr.bf16.mxu0 %v562
      %669 = vmatmul.mubr.bf16.gmra.mxu0 %v451
      %v670 = vpop.f32.mrf.mxu0
      %v671 = vadd.f32 0.0, %v670
      %v672 = vpop.f32.mrf.mxu0
      %v673 = vpop.f32.mrf.mxu0
      %v674 = vadd.f32 0.0, %v673
      %v675 = vpop.f32.mrf.mxu0
      %676 = vmatprep.mubr.bf16.mxu0 %v565
      %677 = vmatmul.mubr.bf16.gmra.mxu0 %v453
      %v678 = vpop.f32.mrf.mxu0
      %v679 = vadd.f32 0.0, %v678
      %v680 = vpop.f32.mrf.mxu0
      %v681 = vpop.f32.mrf.mxu0
      %v682 = vadd.f32 0.0, %v681
      %v683 = vpop.f32.mrf.mxu0
      %684 = vmatprep.mubr.bf16.mxu0 %v568
      %685 = vmatmul.mubr.bf16.gmra.mxu0 %v455
      %v686 = vpop.f32.mrf.mxu0
      %v687 = vadd.f32 0.0, %v686
      %v688 = vpop.f32.mrf.mxu0
      %v689 = vpop.f32.mrf.mxu0
      %v690 = vadd.f32 0.0, %v689
      %v691 = vpop.f32.mrf.mxu0
      %692 = vmatprep.mubr.bf16.mxu0 %v571
      %693 = vmatmul.mubr.bf16.gmra.mxu0 %v457
      %v694 = vpop.f32.mrf.mxu0
      %v695 = vadd.f32 0.0, %v694
      %v696 = vpop.f32.mrf.mxu0
      %v697 = vpop.f32.mrf.mxu0
      %v698 = vadd.f32 0.0, %v697
      %v699 = vpop.f32.mrf.mxu0
      %700 = vmatprep.mubr.bf16.mxu0 %v574
      %701 = vmatmul.mubr.bf16.gmra.mxu0 %v459
      %v702 = vpop.f32.mrf.mxu0
      %v703 = vadd.f32 0.0, %v702
      %v704 = vpop.f32.mrf.mxu0
      %v705 = vpop.f32.mrf.mxu0
      %v706 = vadd.f32 0.0, %v705
      %v707 = vpop.f32.mrf.mxu0
      %708 = vmatprep.mubr.bf16.mxu0 %v577
      %709 = vmatmul.mubr.bf16.gmra.mxu0 %v461
      %v710 = vpop.f32.mrf.mxu0
      %v711 = vadd.f32 0.0, %v710
      %v712 = vpop.f32.mrf.mxu0
      %v713 = vpop.f32.mrf.mxu0
      %v714 = vadd.f32 0.0, %v713
      %v715 = vpop.f32.mrf.mxu0
      %716 = vmatprep.mubr.bf16.mxu0 %v580
      %717 = vmatmul.mubr.bf16.gmra.mxu0 %v463
      %v718 = vpop.f32.mrf.mxu0
      %v719 = vadd.f32 0.0, %v718
      %v720 = vpop.f32.mrf.mxu0
      %v721 = vpop.f32.mrf.mxu0
      %v722 = vadd.f32 0.0, %v721
      %v723 = vpop.f32.mrf.mxu0
      %724 = vmatprep.mubr.bf16.mxu0 %v583
      %725 = vmatmul.mubr.bf16.gmra.mxu0 %v465
      %v726 = vpop.f32.mrf.mxu0
      %v727 = vadd.f32 0.0, %v726
      %v728 = vpop.f32.mrf.mxu0
      %v729 = vpop.f32.mrf.mxu0
      %v730 = vadd.f32 0.0, %v729
      %v731 = vpop.f32.mrf.mxu0
      %732 = vmatprep.mubr.bf16.mxu0 %v586
      %733 = vmatmul.mubr.bf16.gmra.mxu0 %v467
      %v734 = vpop.f32.mrf.mxu0
      %v735 = vadd.f32 0.0, %v734
      %v736 = vpop.f32.mrf.mxu0
      %v737 = vpop.f32.mrf.mxu0
      %v738 = vadd.f32 0.0, %v737
      %v739 = vpop.f32.mrf.mxu0
      %740 = vmatprep.mubr.bf16.mxu0 %v589
      %741 = vmatmul.mubr.bf16.gmra.mxu0 %v469
      %v742 = vpop.f32.mrf.mxu0
      %v743 = vadd.f32 0.0, %v742
      %v744 = vpop.f32.mrf.mxu0
      %v745 = vpop.f32.mrf.mxu0
      %v746 = vadd.f32 0.0, %v745
      %v747 = vpop.f32.mrf.mxu0
      %748 = vmatprep.mubr.bf16.mxu0 %v592
      %749 = vmatmul.mubr.bf16.gmra.mxu0 %v471
      %v750 = vpop.f32.mrf.mxu0
      %v751 = vadd.f32 0.0, %v750
      %v752 = vpop.f32.mrf.mxu0
      %v753 = vpop.f32.mrf.mxu0
      %v754 = vadd.f32 0.0, %v753
      %v755 = vpop.f32.mrf.mxu0
      %756 = vmatprep.mubr.bf16.mxu0 %v595
      %757 = vmatmul.mubr.bf16.gmra.mxu0 %v473
      %v758 = vpop.f32.mrf.mxu0
      %v759 = vadd.f32 0.0, %v758
      %v760 = vpop.f32.mrf.mxu0
      %v761 = vpop.f32.mrf.mxu0
      %v762 = vadd.f32 0.0, %v761
      %v763 = vpop.f32.mrf.mxu0
      %764 = vdwg.mxu0
      %v765 = vadd.f32 %v264, %v639
      %v766 = vadd.f32 %v265, %v642
      %v767 = vadd.f32 %v266, %v647
      %v768 = vadd.f32 %v267, %v650
      %v769 = vadd.f32 %v268, %v655
      %v770 = vadd.f32 %v269, %v658
      %v771 = vadd.f32 %v270, %v663
      %v772 = vadd.f32 %v271, %v666
      %v773 = vadd.f32 %v272, %v671
      %v774 = vadd.f32 %v273, %v674
      %v775 = vadd.f32 %v274, %v679
      %v776 = vadd.f32 %v275, %v682
      %v777 = vadd.f32 %v276, %v687
      %v778 = vadd.f32 %v277, %v690
      %v779 = vadd.f32 %v278, %v695
      %v780 = vadd.f32 %v279, %v698
      %v781 = vadd.f32 %v280, %v703
      %v782 = vadd.f32 %v281, %v706
      %v783 = vadd.f32 %v282, %v711
      %v784 = vadd.f32 %v283, %v714
      %v785 = vadd.f32 %v284, %v719
      %v786 = vadd.f32 %v285, %v722
      %v787 = vadd.f32 %v286, %v727
      %v788 = vadd.f32 %v287, %v730
      %v789 = vadd.f32 %v288, %v735
      %v790 = vadd.f32 %v289, %v738
      %v791 = vadd.f32 %v290, %v743
      %v792 = vadd.f32 %v291, %v746
      %v793 = vadd.f32 %v292, %v751
      %v794 = vadd.f32 %v293, %v754
      %v795 = vadd.f32 %v294, %v759
      %v796 = vadd.f32 %v295, %v762
      %vm797 = vcmask 523264
      %798 = vst.msk [vmem:[#allocation2] sm:$0xff] %vm797, %v765
      %799 = vst.msk [vmem:[#allocation2 + $0x8] sm:$0xff] %vm797, %v766
      %800 = vst.msk [vmem:[#allocation2 + $0x10] sm:$0xff] %vm797, %v767
      %801 = vst.msk [vmem:[#allocation2 + $0x18] sm:$0xff] %vm797, %v768
      %802 = vst.msk [vmem:[#allocation2 + $0x20] sm:$0xff] %vm797, %v769
      %803 = vst.msk [vmem:[#allocation2 + $0x28] sm:$0xff] %vm797, %v770
      %804 = vst.msk [vmem:[#allocation2 + $0x30] sm:$0xff] %vm797, %v771
      %805 = vst.msk [vmem:[#allocation2 + $0x38] sm:$0xff] %vm797, %v772
      %806 = vst.msk [vmem:[#allocation2 + $0x40] sm:$0xff] %vm797, %v773
      %807 = vst.msk [vmem:[#allocation2 + $0x48] sm:$0xff] %vm797, %v774
      %808 = vst.msk [vmem:[#allocation2 + $0x50] sm:$0xff] %vm797, %v775
      %809 = vst.msk [vmem:[#allocation2 + $0x58] sm:$0xff] %vm797, %v776
      %810 = vst.msk [vmem:[#allocation2 + $0x60] sm:$0xff] %vm797, %v777
      %811 = vst.msk [vmem:[#allocation2 + $0x68] sm:$0xff] %vm797, %v778
      %812 = vst.msk [vmem:[#allocation2 + $0x70] sm:$0xff] %vm797, %v779
      %813 = vst.msk [vmem:[#allocation2 + $0x78] sm:$0xff] %vm797, %v780
      %814 = vst.msk [vmem:[#allocation2 + $0x80] sm:$0xff] %vm797, %v781
      %815 = vst.msk [vmem:[#allocation2 + $0x88] sm:$0xff] %vm797, %v782
      %816 = vst.msk [vmem:[#allocation2 + $0x90] sm:$0xff] %vm797, %v783
      %817 = vst.msk [vmem:[#allocation2 + $0x98] sm:$0xff] %vm797, %v784
      %818 = vst.msk [vmem:[#allocation2 + $0xa0] sm:$0xff] %vm797, %v785
      %819 = vst.msk [vmem:[#allocation2 + $0xa8] sm:$0xff] %vm797, %v786
      %820 = vst.msk [vmem:[#allocation2 + $0xb0] sm:$0xff] %vm797, %v787
      %821 = vst.msk [vmem:[#allocation2 + $0xb8] sm:$0xff] %vm797, %v788
      %822 = vst.msk [vmem:[#allocation2 + $0xc0] sm:$0xff] %vm797, %v789
      %823 = vst.msk [vmem:[#allocation2 + $0xc8] sm:$0xff] %vm797, %v790
      %824 = vst.msk [vmem:[#allocation2 + $0xd0] sm:$0xff] %vm797, %v791
      %825 = vst.msk [vmem:[#allocation2 + $0xd8] sm:$0xff] %vm797, %v792
      %826 = vst.msk [vmem:[#allocation2 + $0xe0] sm:$0xff] %vm797, %v793
      %827 = vst.msk [vmem:[#allocation2 + $0xe8] sm:$0xff] %vm797, %v794
      %828 = vst.msk [vmem:[#allocation2 + $0xf0] sm:$0xff] %vm797, %v795
      %829 = vst.msk [vmem:[#allocation2 + $0xf8] sm:$0xff] %vm797, %v796
      // Predicated region
      $region33: #{pallas_matmul.1} parent=27 // pred_check
        %p830 = pneg %p227
      $region34: #{pallas_matmul.1} parent=27 // pred_check_branch
        %832 = sbr.rel (%p830) target = $region36
      $region35: #{pallas_matmul.1} parent=27 // pred_region
        %v833 = vld [vmem:[#allocation2] sm:$0xff]
        %v834 = vld [vmem:[#allocation2 + $0x8] sm:$0xff]
        %v835 = vld [vmem:[#allocation2 + $0x10] sm:$0xff]
        %v836 = vld [vmem:[#allocation2 + $0x18] sm:$0xff]
        %v837 = vld [vmem:[#allocation2 + $0x20] sm:$0xff]
        %v838 = vld [vmem:[#allocation2 + $0x28] sm:$0xff]
        %v839 = vld [vmem:[#allocation2 + $0x30] sm:$0xff]
        %v840 = vld [vmem:[#allocation2 + $0x38] sm:$0xff]
        %v841 = vld [vmem:[#allocation2 + $0x40] sm:$0xff]
        %v842 = vld [vmem:[#allocation2 + $0x48] sm:$0xff]
        %v843 = vld [vmem:[#allocation2 + $0x50] sm:$0xff]
        %v844 = vld [vmem:[#allocation2 + $0x58] sm:$0xff]
        %v845 = vld [vmem:[#allocation2 + $0x60] sm:$0xff]
        %v846 = vld [vmem:[#allocation2 + $0x68] sm:$0xff]
        %v847 = vld [vmem:[#allocation2 + $0x70] sm:$0xff]
        %v848 = vld [vmem:[#allocation2 + $0x78] sm:$0xff]
        %v849 = vld [vmem:[#allocation2 + $0x80] sm:$0xff]
        %v850 = vld [vmem:[#allocation2 + $0x88] sm:$0xff]
        %v851 = vld [vmem:[#allocation2 + $0x90] sm:$0xff]
        %v852 = vld [vmem:[#allocation2 + $0x98] sm:$0xff]
        %v853 = vld [vmem:[#allocation2 + $0xa0] sm:$0xff]
        %v854 = vld [vmem:[#allocation2 + $0xa8] sm:$0xff]
        %v855 = vld [vmem:[#allocation2 + $0xb0] sm:$0xff]
        %v856 = vld [vmem:[#allocation2 + $0xb8] sm:$0xff]
        %v857 = vld [vmem:[#allocation2 + $0xc0] sm:$0xff]
        %v858 = vld [vmem:[#allocation2 + $0xc8] sm:$0xff]
        %v859 = vld [vmem:[#allocation2 + $0xd0] sm:$0xff]
        %v860 = vld [vmem:[#allocation2 + $0xd8] sm:$0xff]
        %v861 = vld [vmem:[#allocation2 + $0xe0] sm:$0xff]
        %v862 = vld [vmem:[#allocation2 + $0xe8] sm:$0xff]
        %v863 = vld [vmem:[#allocation2 + $0xf0] sm:$0xff]
        %v864 = vld [vmem:[#allocation2 + $0xf8] sm:$0xff]
        %865 = vst.msk [vmem:[%s224] sm:$0xff] %vm797, %v833
        %866 = vst.msk [vmem:[%s224 + $0x8] sm:$0xff] %vm797, %v834
        %867 = vst.msk [vmem:[%s224 + $0x10] sm:$0xff] %vm797, %v835
        %868 = vst.msk [vmem:[%s224 + $0x18] sm:$0xff] %vm797, %v836
        %869 = vst.msk [vmem:[%s224 + $0x20] sm:$0xff] %vm797, %v837
        %870 = vst.msk [vmem:[%s224 + $0x28] sm:$0xff] %vm797, %v838
        %871 = vst.msk [vmem:[%s224 + $0x30] sm:$0xff] %vm797, %v839
        %872 = vst.msk [vmem:[%s224 + $0x38] sm:$0xff] %vm797, %v840
        %873 = vst.msk [vmem:[%s224 + $0x40] sm:$0xff] %vm797, %v841
        %874 = vst.msk [vmem:[%s224 + $0x48] sm:$0xff] %vm797, %v842
        %875 = vst.msk [vmem:[%s224 + $0x50] sm:$0xff] %vm797, %v843
        %876 = vst.msk [vmem:[%s224 + $0x58] sm:$0xff] %vm797, %v844
        %877 = vst.msk [vmem:[%s224 + $0x60] sm:$0xff] %vm797, %v845
        %878 = vst.msk [vmem:[%s224 + $0x68] sm:$0xff] %vm797, %v846
        %879 = vst.msk [vmem:[%s224 + $0x70] sm:$0xff] %vm797, %v847
        %880 = vst.msk [vmem:[%s224 + $0x78] sm:$0xff] %vm797, %v848
        %881 = vst.msk [vmem:[%s224 + $0x80] sm:$0xff] %vm797, %v849
        %882 = vst.msk [vmem:[%s224 + $0x88] sm:$0xff] %vm797, %v850
        %883 = vst.msk [vmem:[%s224 + $0x90] sm:$0xff] %vm797, %v851
        %884 = vst.msk [vmem:[%s224 + $0x98] sm:$0xff] %vm797, %v852
        %885 = vst.msk [vmem:[%s224 + $0xa0] sm:$0xff] %vm797, %v853
        %886 = vst.msk [vmem:[%s224 + $0xa8] sm:$0xff] %vm797, %v854
        %887 = vst.msk [vmem:[%s224 + $0xb0] sm:$0xff] %vm797, %v855
        %888 = vst.msk [vmem:[%s224 + $0xb8] sm:$0xff] %vm797, %v856
        %889 = vst.msk [vmem:[%s224 + $0xc0] sm:$0xff] %vm797, %v857
        %890 = vst.msk [vmem:[%s224 + $0xc8] sm:$0xff] %vm797, %v858
        %891 = vst.msk [vmem:[%s224 + $0xd0] sm:$0xff] %vm797, %v859
        %892 = vst.msk [vmem:[%s224 + $0xd8] sm:$0xff] %vm797, %v860
        %893 = vst.msk [vmem:[%s224 + $0xe0] sm:$0xff] %vm797, %v861
        %894 = vst.msk [vmem:[%s224 + $0xe8] sm:$0xff] %vm797, %v862
        %895 = vst.msk [vmem:[%s224 + $0xf0] sm:$0xff] %vm797, %v863
        %896 = vst.msk [vmem:[%s224 + $0xf8] sm:$0xff] %vm797, %v864
      $region36: #{pallas_matmul.1} parent=27 // pred_fallthru
        _
      %s897 = smul.u32 32, %s18
      %p898 = scmp.lt.s32.totalorder %s897, 127
      %s899 = scalar_select %p898, %s897, 127
      %p900 = scmp.lt.s32.totalorder %s19, 0
      %s901 = scalar_select %p900, %s19, 0
      %s902 = sadd.s32 %s901, %s899
      %s903 = smul.addr %s902, 8
      %s904 = scalar_lea.vmem %s2, %s903
      // Predicated region
      $region37: #{pallas_matmul.1} parent=27 // pred_check
        %p905 = pneg %p108
      $region38: #{pallas_matmul.1} parent=27 // pred_check_branch
        %907 = sbr.rel (%p905) target = $region40
      $region39: #{pallas_matmul.1} parent=27 // pred_region
        %s908 = smul.u32 32, %s18
      $region40: #{pallas_matmul.1} parent=27 // pred_fallthru
        _
    $region28: #{pallas_matmul.1} parent=5 // pred_fallthru
      _
    %p909 = scmp.le.s32.totalorder 2, %s8
    // Predicated region
    $region41: #{pallas_matmul.1} parent=5 // pred_check
      %p910 = pneg %p909
    $region42: #{pallas_matmul.1} parent=5 // pred_check_branch
      %912 = sbr.rel (%p910) target = $region44
    $region43: #{pallas_matmul.1} parent=5 // pred_region
      %s913 = ssub.s32 %s8, 2
      // Predicated region
      $region45: #{pallas_matmul.1} parent=43 // pred_check
        %p914 = pneg %p114
      $region46: #{pallas_matmul.1} parent=43 // pred_check_branch
        %916 = sbr.rel (%p914) target = $region48
      $region47: #{pallas_matmul.1} parent=43 // pred_region
        %s917 = smul.u32 32, %s21
        %p918 = scmp.lt.s32.totalorder %s917, 127
        %s919 = scalar_select %p918, %s917, 127
        %p920 = scmp.lt.s32.totalorder %s22, 0
        %s921 = scalar_select %p920, %s22, 0
        %s922 = sadd.s32 %s921, %s919
        %s923 = smul.addr %s922, 8
        %s924 = scalar_lea.vmem %s2, %s923
      $region48: #{pallas_matmul.1} parent=43 // pred_fallthru
        _
    $region44: #{pallas_matmul.1} parent=5 // pred_fallthru
      _
  $region6: #{pallas_matmul.1} parent=0 // loop_footer
    %s12 = sadd.s32 1, %s8
  $region7: #{pallas_matmul.1} parent=0 // loop_footer_branch
    %7 = sbr.rel target = $region3
  $region8: #{pallas_matmul.1} parent=0 // loop_exit
    _

</llo_original>
